<compile_context>
chip_gen: v5e
topology: v5e:2x2
jax: 0.10.0
libtpu: 0.0.40
codegen_flags: <defaults>
</compile_context>

<pallas_src>
import functools
import math

import jax
import jax.numpy as jnp
from jax import lax
from jax.experimental import pallas as pl
from jax.experimental.pallas import tpu as pltpu


# --------------------------------------------------------------------------
# Per-chip sizing helpers
# --------------------------------------------------------------------------
def _round_up(x, m):
    return ((x + m - 1) // m) * m


@functools.lru_cache(maxsize=None)
def _vmem_limit():
    """Scoped VMEM budget: ~half of physical (64 MiB on v5e/v6e, 32 MiB on v7x)."""
    phys = 64 * 1024 * 1024                      # conservative fallback (v7x-safe)
    try:
        phys = int(pltpu.get_tpu_info().vmem_capacity_bytes)
    except Exception:
        pass
    limit = min(phys // 2, 96 * 1024 * 1024)
    return int(max(limit, 32 * 1024 * 1024))


def _choose_time_chunk(T, B, H, num_dir, vmem_limit):
    """Steps per recurrence chunk.  Tc*B is kept a multiple of 16 so the
    flattened (Tc*B)-row matmul chunks stay sublane-aligned even for bf16."""
    align = 16 // math.gcd(B, 16)
    # double-buffered bf16 gx-in + hseq-out blocks, per time step
    per_step = 2 * 2 * num_dir * (B * 4 * H + B * H)
    fixed = (2 * num_dir * H * 4 * H * 4          # W_hh buffers
             + 4 * num_dir * B * H * 4 + (1 << 16))
    budget = int(vmem_limit * 0.7)
    tc = max(1, (budget - fixed) // max(per_step, 1))
    tc = min(tc, 128)                             # amortizes ~0.35us/grid-step
    tc = max(align, (tc // align) * align)
    return min(tc, _round_up(T, align))


def _choose_row_group(nc, t_chunk, B, in_row_bytes, out_row_bytes, weight_bytes,
                      vmem_limit):
    """How many recurrence chunks to group per matmul-kernel grid step (K1/K3)."""
    budget = int(vmem_limit * 0.7)
    best = 1
    for g in range(1, nc + 1):
        if nc % g:
            continue
        rows = g * t_chunk * B
        if rows > 4096:
            break
        need = 2 * rows * (in_row_bytes + out_row_bytes) + 2 * weight_bytes
        if need <= budget:
            best = g
    return best


def _choose_unroll(B, H, num_dir, t_chunk):
    """Unroll the step loop only as far as vreg pressure allows (64 x 4 KiB)."""
    live_vregs = max(1, (7 * num_dir * B * H) // 1024)   # f32 live values / step
    u = max(1, min(8, 32 // live_vregs))
    return True if u >= t_chunk else u


# --------------------------------------------------------------------------
# Kernel 1: fused input projection   gates = sum_p x_p @ W[p] + bias  (both dirs)
# --------------------------------------------------------------------------
def _input_proj_kernel(*refs, num_parts, part_dim, num_dir, gate_width):
    P, Dp, ND, GW = num_parts, part_dim, num_dir, gate_width
    x_refs = refs[:P]
    w_ref, b_ref, gx_ref = refs[P], refs[P + 1], refs[P + 2]
    acc = jnp.dot(x_refs[0][...].astype(jnp.float32), w_ref[0:Dp, :],
                  preferred_element_type=jnp.float32)
    for p in range(1, P):                                  # static python loop
        acc = acc + jnp.dot(x_refs[p][...].astype(jnp.float32),
                            w_ref[p * Dp:(p + 1) * Dp, :],
                            preferred_element_type=jnp.float32)
    acc = acc + b_ref[...]                                 # bias added once here
    for d in range(ND):                                    # split fused gates
        gx_ref[d] = acc[:, d * GW:(d + 1) * GW].astype(gx_ref.dtype)


def _run_input_proj(parts, w_cat, bias, *, num_dir, hidden, r_chunk, num_chunks,
                    out_dtype, vmem_limit):
    P = len(parts)
    TB, Dp = parts[0].shape
    GW = 4 * hidden
    in_specs = [pl.BlockSpec((r_chunk, Dp), lambda c: (c, 0)) for _ in range(P)]
    in_specs += [pl.BlockSpec(w_cat.shape, lambda c: (0, 0)),
                 pl.BlockSpec(bias.shape, lambda c: (0, 0))]
    return pl.pallas_call(
        functools.partial(_input_proj_kernel, num_parts=P, part_dim=Dp,
                          num_dir=num_dir, gate_width=GW),
        grid=(num_chunks,),
        in_specs=in_specs,
        out_specs=pl.BlockSpec((num_dir, r_chunk, GW), lambda c: (0, c, 0)),
        out_shape=jax.ShapeDtypeStruct((num_dir, TB, GW), out_dtype),
        compiler_params=pltpu.CompilerParams(
            dimension_semantics=("parallel",),
            vmem_limit_bytes=vmem_limit),
    )(*parts, w_cat, bias)


# --------------------------------------------------------------------------
# Kernel 2: LSTM recurrence, both directions stepped in the same loop body
# --------------------------------------------------------------------------
def _lstm_recurrence_kernel(*refs, hidden, t_chunk, num_chunks, num_dir, unroll):
    H, Tc, nc, ND = hidden, t_chunk, num_chunks, num_dir
    gx_refs = refs[:ND]                          # (Tc, B, 4H) per direction
    len_ref, whh_ref = refs[ND], refs[ND + 1]
    hseq_refs = refs[ND + 2:2 * ND + 2]          # (Tc, B, H) per direction
    hlast_ref = refs[2 * ND + 2]                 # (ND, B, H)
    h_sc, c_sc = refs[2 * ND + 3], refs[2 * ND + 4]

    c = pl.program_id(0)

    @pl.when(c == 0)                             # fresh state at chunk 0
    def _():
        h_sc[...] = jnp.zeros(h_sc.shape, h_sc.dtype)
        c_sc[...] = jnp.zeros(c_sc.shape, c_sc.dtype)

    lens = len_ref[...]                          # (B, 1) int32, hoisted
    whh = [whh_ref[d] for d in range(ND)]        # (H, 4H) f32, hoisted
    # original-time offset of this grid step's chunk, per direction
    t0 = [c * Tc] + ([(nc - 1 - c) * Tc] if ND == 2 else [])

    def step(i, carry):
        hs, cs = carry
        new_h, new_c = [], []
        for d in range(ND):                      # directions interleave on the
            r = i if d == 0 else Tc - 1 - i      # serial critical path
            gates = (gx_refs[d][r].astype(jnp.float32)
                     + jnp.dot(hs[d], whh[d], preferred_element_type=jnp.float32))
            i_g = jax.nn.sigmoid(gates[:, :H])
            f_g = jax.nn.sigmoid(gates[:, H:2 * H])
            g_g = jnp.tanh(gates[:, 2 * H:3 * H])
            o_g = jax.nn.sigmoid(gates[:, 3 * H:])
            c_new = f_g * cs[d] + i_g * g_g
            h_new = o_g * jnp.tanh(c_new)
            valid = (t0[d] + r) < lens           # (B, 1), trailing padding only
            hseq_refs[d][r] = jnp.where(valid, h_new, 0.0).astype(hseq_refs[d].dtype)
            new_h.append(jnp.where(valid, h_new, hs[d]))
            new_c.append(jnp.where(valid, c_new, cs[d]))
        return tuple(new_h), tuple(new_c)

    init = (tuple(h_sc[d] for d in range(ND)),
            tuple(c_sc[d] for d in range(ND)))
    hs, cs = lax.fori_loop(0, Tc, step, init, unroll=unroll)
    for d in range(ND):                          # carry state to the next chunk
        h_sc[d] = hs[d]
        c_sc[d] = cs[d]

    @pl.when(c == nc - 1)
    def _():
        for d in range(ND):
            hlast_ref[d] = hs[d]                 # h_n per direction


def _run_lstm_recurrence(gates_x, lens_i32, whh, *, hidden, t_chunk, num_dir,
                         seq_dtype, vmem_limit):
    ND, T_pad, B, GW = gates_x.shape
    H, Tc = hidden, t_chunk
    nc = T_pad // Tc

    gx_specs = [pl.BlockSpec((None, Tc, B, GW), lambda c: (0, c, 0, 0))]
    hseq_specs = [pl.BlockSpec((Tc, B, H), lambda c: (c, 0, 0))]
    if ND == 2:   # backward direction walks the original-time chunks in reverse
        gx_specs.append(pl.BlockSpec((None, Tc, B, GW),
                                     lambda c: (1, nc - 1 - c, 0, 0)))
        hseq_specs.append(pl.BlockSpec((Tc, B, H),
                                       lambda c: (nc - 1 - c, 0, 0)))

    unroll = _choose_unroll(B, H, ND, Tc)
    kernel = functools.partial(_lstm_recurrence_kernel, hidden=H, t_chunk=Tc,
                               num_chunks=nc, num_dir=ND, unroll=unroll)
    outs = pl.pallas_call(
        kernel,
        grid=(nc,),
        in_specs=gx_specs + [pl.BlockSpec((B, 1), lambda c: (0, 0)),
                             pl.BlockSpec((ND, H, GW), lambda c: (0, 0, 0))],
        out_specs=tuple(hseq_specs)
                  + (pl.BlockSpec((ND, B, H), lambda c: (0, 0, 0)),),
        out_shape=tuple(jax.ShapeDtypeStruct((T_pad, B, H), seq_dtype)
                        for _ in range(ND))
                  + (jax.ShapeDtypeStruct((ND, B, H), jnp.float32),),
        scratch_shapes=[pltpu.VMEM((ND, B, H), jnp.float32),   # h across chunks
                        pltpu.VMEM((ND, B, H), jnp.float32)],  # c across chunks
        compiler_params=pltpu.CompilerParams(
            dimension_semantics=("arbitrary",),
            vmem_limit_bytes=vmem_limit),
    )(*([gates_x] * ND), lens_i32, whh)
    return list(outs[:ND]), outs[ND]


# --------------------------------------------------------------------------
# Kernel 3: attend_fc + sigmoid, lane-dense padded output columns
# --------------------------------------------------------------------------
def _attend_kernel(*refs, num_parts, part_dim):
    P, Dp = num_parts, part_dim
    h_refs = refs[:P]
    w_ref, b_ref, o_ref = refs[P], refs[P + 1], refs[P + 2]
    acc = jnp.dot(h_refs[0][...].astype(jnp.float32), w_ref[0:Dp, :],
                  preferred_element_type=jnp.float32)
    for p in range(1, P):
        acc = acc + jnp.dot(h_refs[p][...].astype(jnp.float32),
                            w_ref[p * Dp:(p + 1) * Dp, :],
                            preferred_element_type=jnp.float32)
    o_ref[...] = jax.nn.sigmoid(acc + b_ref[...])


def _run_attend(parts, w_pad, b_pad, *, r_chunk, num_chunks, vmem_limit):
    P = len(parts)
    TB, Dp = parts[0].shape
    Cp = w_pad.shape[-1]
    in_specs = [pl.BlockSpec((r_chunk, Dp), lambda c: (c, 0)) for _ in range(P)]
    in_specs += [pl.BlockSpec(w_pad.shape, lambda c: (0, 0)),
                 pl.BlockSpec(b_pad.shape, lambda c: (0, 0))]
    return pl.pallas_call(
        functools.partial(_attend_kernel, num_parts=P, part_dim=Dp),
        grid=(num_chunks,),
        in_specs=in_specs,
        out_specs=pl.BlockSpec((r_chunk, Cp), lambda c: (c, 0)),
        out_shape=jax.ShapeDtypeStruct((TB, Cp), jnp.float32),
        compiler_params=pltpu.CompilerParams(
            dimension_semantics=("parallel",),
            vmem_limit_bytes=vmem_limit),
    )(*parts, w_pad, b_pad)


# --------------------------------------------------------------------------
# Parameters & forward
# --------------------------------------------------------------------------
def init_seq_encoder_params(key, input_size, hidden_size, num_layers,
                            out_channels, bidirect=True):
    ND = 2 if bidirect else 1
    H = hidden_size
    k = 1.0 / math.sqrt(H)
    keys = jax.random.split(key, num_layers * ND * 4 + 2)
    idx = 0
    params = {"lstm": {}}
    for l in range(num_layers):
        din = input_size if l == 0 else H * ND
        wih_d, whh_d, b_d = [], [], []
        for _d in range(ND):
            w_ih = jax.random.uniform(keys[idx], (din, 4 * H), minval=-k, maxval=k); idx += 1
            w_hh = jax.random.uniform(keys[idx], (H, 4 * H), minval=-k, maxval=k); idx += 1
            b_ih = jax.random.uniform(keys[idx], (1, 4 * H), minval=-k, maxval=k); idx += 1
            b_hh = jax.random.uniform(keys[idx], (1, 4 * H), minval=-k, maxval=k); idx += 1
            wih_d.append(w_ih); whh_d.append(w_hh); b_d.append(b_ih + b_hh)
        # fused layouts: gate columns [d*4H:(d+1)*4H] belong to direction d
        w_cat = jnp.concatenate(wih_d, axis=1).astype(jnp.float32)    # (Din, ND*4H)
        b_cat = jnp.concatenate(b_d, axis=1).astype(jnp.float32)      # (1,  ND*4H)
        whh = jnp.stack(whh_d).astype(jnp.float32)                    # (ND, H, 4H)
        params["lstm"][l] = (w_cat, whh, b_cat)
    w_att = jax.random.uniform(keys[idx], (ND * H, out_channels),
                               minval=-k, maxval=k); idx += 1
    b_att = jax.random.uniform(keys[idx], (1, out_channels), minval=-k, maxval=k)
    params["w_att"] = w_att.astype(jnp.float32)   # rows [d*H:(d+1)*H] act on dir d
    params["b_att"] = b_att.astype(jnp.float32)
    return params


def seq_encoder_forward(params, points, lengths, *, input_size, hidden_size,
                        num_layers=2, bidirect=True, act_dtype=jnp.bfloat16):
    """Returns (intensities (B, T, C), last_hidden (B, num_dir*num_layers*H))."""
    B, T, D = points.shape
    if D != input_size:
        points = points[:, :, :input_size]         # matches PyTorch truncation
    ND = 2 if bidirect else 1
    H = hidden_size
    vmem = _vmem_limit()
    act_bytes = jnp.dtype(act_dtype).itemsize

    Tc = _choose_time_chunk(T, B, H, ND, vmem)
    T_pad = _round_up(T, Tc)
    nc = T_pad // Tc

    x = jnp.transpose(points.astype(jnp.float32), (1, 0, 2))     # (T, B, Din)
    if T_pad != T:
        x = jnp.pad(x, ((0, T_pad - T), (0, 0), (0, 0)))
    lens = jnp.asarray(lengths, jnp.int32).reshape(B, 1)

    parts = [x.reshape(T_pad * B, input_size)]                    # layer-0 input
    last_hiddens = []     # order: l0_fwd, l0_bwd, l1_fwd, l1_bwd (PyTorch h_n)
    for l in range(num_layers):
        w_cat, whh, b_cat = params["lstm"][l]
        in_row = sum(p.shape[-1] * p.dtype.itemsize for p in parts)
        out_row = ND * 4 * H * act_bytes
        G = _choose_row_group(nc, Tc, B, in_row, out_row, int(w_cat.size) * 4, vmem)
        gx = _run_input_proj(parts, w_cat, b_cat, num_dir=ND, hidden=H,
                             r_chunk=G * Tc * B, num_chunks=nc // G,
                             out_dtype=act_dtype, vmem_limit=vmem)
        gx = gx.reshape(ND, T_pad, B, 4 * H)                      # free reshape
        hseq_parts, hlast = _run_lstm_recurrence(
            gx, lens, whh, hidden=H, t_chunk=Tc, num_dir=ND,
            seq_dtype=act_dtype, vmem_limit=vmem)
        last_hiddens.append(hlast)                                # (ND, B, H) f32
        parts = [hp.reshape(T_pad * B, H) for hp in hseq_parts]   # next layer

    # attend_fc + sigmoid with lane-dense (>=128 col) zero-padded output
    C = params["b_att"].shape[-1]
    Cp = max(128, _round_up(C, 128))
    w_pad = jnp.pad(params["w_att"], ((0, 0), (0, Cp - C)))
    b_pad = jnp.pad(params["b_att"], ((0, 0), (0, Cp - C)))
    in_row = ND * H * act_bytes
    G = _choose_row_group(nc, Tc, B, in_row, Cp * 4, int(w_pad.size) * 4, vmem)
    inten_flat = _run_attend(parts, w_pad, b_pad, r_chunk=G * Tc * B,
                             num_chunks=nc // G, vmem_limit=vmem)
    inten = inten_flat[:, :C].reshape(T_pad, B, C)[:T]            # (T, B, C)
    inten = jnp.transpose(inten, (1, 0, 2))                       # (B, T, C)
    mask = (jnp.arange(T)[None, :, None]
            < jnp.asarray(lengths)[:, None, None]).astype(inten.dtype)
    intensities = inten * mask            # pad_packed_sequence(padding_value=0)

    # replicate PyTorch's `last_hidden.view(batch, -1)` on the (L*ND, B, H) tensor
    h_n = jnp.concatenate(last_hiddens, axis=0)
    last_hidden = h_n.reshape(B, -1)
    return intensities, last_hidden


# --------------------------------------------------------------------------
# Pure-JAX reference (correctness check)
# --------------------------------------------------------------------------
def _reference_forward(params, points, lengths, *, input_size, hidden_size,
                       num_layers, bidirect=True):
    B, T, _ = points.shape
    pts = points[:, :, :input_size].astype(jnp.float32)
    ND = 2 if bidirect else 1
    H = hidden_size
    mask = (jnp.arange(T)[None, :] < jnp.asarray(lengths)[:, None]).astype(jnp.float32)
    layer_in = pts
    lasts = []
    for l in range(num_layers):
        w_cat, whh, b_cat = params["lstm"][l]
        outs = []
        for d in range(ND):
            wih = w_cat[:, d * 4 * H:(d + 1) * 4 * H]
            b = b_cat[:, d * 4 * H:(d + 1) * 4 * H]
            h = jnp.zeros((B, H), jnp.float32)
            c = jnp.zeros((B, H), jnp.float32)
            seq = [None] * T
            trange = range(T) if d == 0 else range(T - 1, -1, -1)
            for t in trange:
                g = layer_in[:, t] @ wih + h @ whh[d] + b
                i_g = jax.nn.sigmoid(g[:, :H]); f_g = jax.nn.sigmoid(g[:, H:2 * H])
                g_g = jnp.tanh(g[:, 2 * H:3 * H]); o_g = jax.nn.sigmoid(g[:, 3 * H:])
                c_new = f_g * c + i_g * g_g
                h_new = o_g * jnp.tanh(c_new)
                m = mask[:, t:t + 1]
                h = m * h_new + (1 - m) * h
                c = m * c_new + (1 - m) * c
                seq[t] = m * h_new
            outs.append(jnp.stack(seq, axis=1))
            lasts.append(h)
        layer_in = jnp.concatenate(outs, axis=-1)
    inten = jax.nn.sigmoid(layer_in @ params["w_att"] + params["b_att"]) * mask[:, :, None]
    h_n = jnp.stack(lasts, axis=0)
    return inten, h_n.reshape(B, -1)


# --------------------------------------------------------------------------
if __name__ == "__main__":
    INPUT_SIZE = 4
    HIDDEN = 32
    NUM_LAYERS = 2
    OUT_CHANNELS = 1
    B, T, POINT_DIM = 2, 8, 5          # point_dim > input_size exercises truncation

    root = jax.random.PRNGKey(0)
    k_param, k_data = jax.random.split(root)

    params = init_seq_encoder_params(k_param, INPUT_SIZE, HIDDEN, NUM_LAYERS,
                                     OUT_CHANNELS, bidirect=True)
    points = jax.random.normal(k_data, (B, T, POINT_DIM), dtype=jnp.float32)
    lengths = jnp.array([8, 5], dtype=jnp.int32)   # trailing padding (packed input)

    intensities, last_hidden = seq_encoder_forward(
        params, points, lengths,
        input_size=INPUT_SIZE, hidden_size=HIDDEN, num_layers=NUM_LAYERS)
    jax.block_until_ready((intensities, last_hidden))

    assert intensities.shape == (B, T, OUT_CHANNELS)
    assert last_hidden.shape == (B, 2 * NUM_LAYERS * HIDDEN)
    # padded steps must be exactly zero (pad_packed_sequence semantics)
    assert float(jnp.abs(intensities[1, 5:, :]).max()) == 0.0

    ref_int, ref_last = _reference_forward(
        params, points, lengths, input_size=INPUT_SIZE, hidden_size=HIDDEN,
        num_layers=NUM_LAYERS, bidirect=True)

    # default (bf16 activations) run -- loose tolerance
    assert float(jnp.abs(intensities - ref_int).max()) < 0.1
    assert float(jnp.abs(last_hidden - ref_last).max()) < 0.1

    # f32 activations re-validation (tighter tolerance), per perf-review concern
    int32_, last32_ = seq_encoder_forward(
        params, points, lengths, input_size=INPUT_SIZE, hidden_size=HIDDEN,
        num_layers=NUM_LAYERS, act_dtype=jnp.float32)
    jax.block_until_ready((int32_, last32_))
    assert float(jnp.abs(int32_ - ref_int).max()) < 0.05
    assert float(jnp.abs(last32_ - ref_last).max()) < 0.05

    print("KERNEL_OK")
</pallas_src>

<mosaic_0001>
module attributes {stable_mosaic.version = 11 : i64} {
  func.func @_input_proj_kernel(%arg0: i32, %arg1: memref<16x4xf32, #tpu.memory_space<vmem>>, %arg2: memref<4x256xf32, #tpu.memory_space<vmem>>, %arg3: memref<1x256xf32, #tpu.memory_space<vmem>>, %arg4: memref<2x16x128xbf16, #tpu.memory_space<vmem>>) attributes {dimension_semantics = [#tpu.dimension_semantics<parallel>], iteration_bounds = array<i64: 1>, scalar_prefetch = 0 : i64, scratch_operands = 0 : i64, tpu.core_type = #tpu.core_type<tc>, window_params = [{transform_indices = @transform_0, window_bounds = array<i64: 16, 4>}, {pipeline_mode = #tpu.pipeline_mode<synchronous>, transform_indices = @transform_1, window_bounds = array<i64: 4, 256>}, {pipeline_mode = #tpu.pipeline_mode<synchronous>, transform_indices = @transform_2, window_bounds = array<i64: 1, 256>}, {transform_indices = @transform_3, window_bounds = array<i64: 2, 16, 128>}]} {
    %c0 = arith.constant 0 : index
    %c0_0 = arith.constant 0 : index
    %0 = vector.load %arg1[%c0, %c0_0] : memref<16x4xf32, #tpu.memory_space<vmem>>, vector<16x4xf32>
    %c0_1 = arith.constant 0 : index
    %c0_2 = arith.constant 0 : index
    %1 = vector.load %arg2[%c0_1, %c0_2] : memref<4x256xf32, #tpu.memory_space<vmem>>, vector<4x256xf32>
    %cst = arith.constant dense<0.000000e+00> : vector<16x256xf32>
    %2 = tpu.matmul %0, %1, %cst {dimension_numbers = #tpu.dot_dimension_numbers<[1], [0], [0], [1], [0, 0, 1, 1], [], []>} : vector<16x4xf32>, vector<4x256xf32>, vector<16x256xf32> -> vector<16x256xf32>
    %c0_3 = arith.constant 0 : index
    %c0_4 = arith.constant 0 : index
    %3 = vector.load %arg3[%c0_3, %c0_4] : memref<1x256xf32, #tpu.memory_space<vmem>>, vector<1x256xf32>
    %4 = vector.broadcast %3 : vector<1x256xf32> to vector<16x256xf32>
    %5 = arith.addf %2, %4 : vector<16x256xf32>
    %6 = vector.extract_strided_slice %5 {offsets = [0, 0], sizes = [16, 128], strides = [1, 1]} : vector<16x256xf32> to vector<16x128xf32>
    %7 = arith.truncf %6 : vector<16x128xf32> to vector<16x128xbf16>
    %c0_5 = arith.constant 0 : index
    %c0_6 = arith.constant 0 : index
    %c0_7 = arith.constant 0 : index
    %8 = vector.load %arg4[%c0_5, %c0_6, %c0_7] : memref<2x16x128xbf16, #tpu.memory_space<vmem>>, vector<1x16x128xbf16>
    %9 = vector.shape_cast %8 : vector<1x16x128xbf16> to vector<16x128xbf16>
    %10 = vector.shape_cast %7 : vector<16x128xbf16> to vector<1x16x128xbf16>
    tpu.vector_store %arg4[%c0_5, %c0_6, %c0_7], %10 {strides = array<i32>} : memref<2x16x128xbf16, #tpu.memory_space<vmem>>, vector<1x16x128xbf16>,
    %11 = vector.extract_strided_slice %5 {offsets = [0, 128], sizes = [16, 128], strides = [1, 1]} : vector<16x256xf32> to vector<16x128xf32>
    %12 = arith.truncf %11 : vector<16x128xf32> to vector<16x128xbf16>
    %c1 = arith.constant 1 : index
    %c0_8 = arith.constant 0 : index
    %c0_9 = arith.constant 0 : index
    %13 = vector.load %arg4[%c1, %c0_8, %c0_9] : memref<2x16x128xbf16, #tpu.memory_space<vmem>>, vector<1x16x128xbf16>
    %14 = vector.shape_cast %13 : vector<1x16x128xbf16> to vector<16x128xbf16>
    %15 = vector.shape_cast %12 : vector<16x128xbf16> to vector<1x16x128xbf16>
    tpu.vector_store %arg4[%c1, %c0_8, %c0_9], %15 {strides = array<i32>} : memref<2x16x128xbf16, #tpu.memory_space<vmem>>, vector<1x16x128xbf16>,
    return
  }
  func.func @transform_0(%arg0: i32) -> (i32, i32) {
    %c0_i32 = arith.constant 0 : i32
    %c0_i32_0 = arith.constant 0 : i32
    return %arg0, %c0_i32 : i32, i32
  }
  func.func @transform_1(%arg0: i32) -> (i32, i32) {
    %c0_i32 = arith.constant 0 : i32
    %c0_i32_0 = arith.constant 0 : i32
    %c0_i32_1 = arith.constant 0 : i32
    return %c0_i32, %c0_i32_0 : i32, i32
  }
  func.func @transform_2(%arg0: i32) -> (i32, i32) {
    %c0_i32 = arith.constant 0 : i32
    %c0_i32_0 = arith.constant 0 : i32
    %c0_i32_1 = arith.constant 0 : i32
    return %c0_i32, %c0_i32_0 : i32, i32
  }
  func.func @transform_3(%arg0: i32) -> (i32, i32, i32) {
    %c0_i32 = arith.constant 0 : i32
    %c0_i32_0 = arith.constant 0 : i32
    %c0_i32_1 = arith.constant 0 : i32
    return %c0_i32, %arg0, %c0_i32_0 : i32, i32, i32
  }
}

</mosaic_0001>

<llo_original>
// kernel: tpu_custom_call.1
$region0: #{tpu_custom_call.1}
  #allocation0 [shape = 'u32[]', space=smem, size = 0x4, offset = 0x4, fixed_abs, tag = 'smem constant byte address 0x4 - core index']
  #allocation1 [shape = 'u32[72,128]{1,0:T(1,128)}', space=vmem, size = 0x9000, scoped, tag = 'internal scratch']
  %s0 = inlined_call_operand.vmem [shape: f32[16,4], index: 0, kind: input, shape index: {}]
  %s1 = inlined_call_operand.vmem [shape: f32[4,256], index: 1, kind: input, shape index: {}]
  %s2 = inlined_call_operand.vmem [shape: f32[1,256], index: 2, kind: input, shape index: {}]
  %s3 = inlined_call_operand.hbm [shape: bf16[2,16,128], index: 3, kind: output, shape index: {}]
  %s4 = sld [smem:[#allocation0]]
  $region22: #{tpu_custom_call.1} parent=0
    _
  %s6 = ssub.s32 1, %s4
  %s7 = scalar_select 0, %s6, %s4
  $region1: #{tpu_custom_call.1} parent=0
    #allocation2 [shape = 'u8[8192]{0}', space=vmem, size = 0x2000, scoped, tag = 'output window, operand 0, single buffered']
    #allocation3 [shape = 's32[1]{0}', space=sflag, size = 0x4, scoped, tag = 'scoped memory for tpu_custom_call.1']
    %8 = vsyncpa [#allocation3], 0
    // Predicated region
    $region2: #{tpu_custom_call.1} parent=1 // pred_check
      _
    $region3: #{tpu_custom_call.1} parent=1 // pred_check_branch
      %10 = sbr.rel (0) target = $region5
    $region4: #{tpu_custom_call.1} parent=1 // pred_region
      _
    $region5: #{tpu_custom_call.1} parent=1 // pred_fallthru
      _
    // Predicated region
    $region6: #{tpu_custom_call.1} parent=1 // pred_check
      _
    $region7: #{tpu_custom_call.1} parent=1 // pred_check_branch
      %12 = sbr.rel (0) target = $region9
    $region8: #{tpu_custom_call.1} parent=1 // pred_region
      _
    $region9: #{tpu_custom_call.1} parent=1 // pred_fallthru
      _
    // Predicated region
    $region10: #{tpu_custom_call.1} parent=1 // pred_check
      _
    $region11: #{tpu_custom_call.1} parent=1 // pred_check_branch
      %14 = sbr.rel (0) target = $region13
    $region12: #{tpu_custom_call.1} parent=1 // pred_region
      _
    $region13: #{tpu_custom_call.1} parent=1 // pred_fallthru
      _
    %v15 = vld [vmem:[%s0] sm:$0xff]
    %v16 = vld [vmem:[%s0 + $0x8] sm:$0xff]
    %v17 = vld [vmem:[%s1] sm:$0xff]
    %v18 = vld [vmem:[%s2] sm:$0x3]
    %v20 = vperm.slane %v18, 0
    %v21 = vperm.slane %v18, 1
    %25 = vst [vmem:[#allocation1] ss:$2 sm:$0xff] %v17
    %v26 = vld.sshfl [vmem:[#allocation1] sm:$0xff pattern:$0x75316420]
    %v27 = vld.sshfl [vmem:[#allocation1 + $0x8] sm:$0xff pattern:$0x75316420]
    %vm28 = vcmask 31744
    %v30 = vsel %vm28, %v15, 0
    %v33 = vsel %vm28, %v16, 0
    %vm35 = vcmask 1043456
    %v36 = vsel %vm35, %v26, 0
    %v38 = vsel %vm35, %v27, 0
    %40 = vmatpush.msra.mxu0 0.0
    %41 = vmatpush.msra.mxu0 0.0
    %42 = vmatpush.msra.mxu0 0.0
    %43 = vmatpush.msra.mxu0 0.0
    %44 = vmatpush.msra.mxu0 0.0
    %45 = vmatpush.msra.mxu0 0.0
    %46 = vmatpush.msra.mxu0 0.0
    %47 = vmatpush.msra.mxu0 0.0
    %48 = vmatpush.msra.mxu0 0.0
    %49 = vmatpush.msra.mxu0 0.0
    %50 = vmatpush.msra.mxu0 0.0
    %51 = vmatpush.msra.mxu0 0.0
    %52 = vmatpush.msra.mxu0 0.0
    %53 = vmatpush.msra.mxu0 0.0
    %54 = vmatpush.msra.mxu0 0.0
    %55 = vmatpush.msra.mxu0 %v36
    %56 = vmatmul.f32.gmra.mxu0 %v30
    %v57 = vpop.f32.mrf.mxu0
    %v58 = vadd.f32 %v20, %v57
    %59 = vmatmul.f32.gmra.mxu0 %v33
    %v60 = vpop.f32.mrf.mxu0
    %v61 = vadd.f32 %v20, %v60
    %62 = vdwg.mxu0
    %63 = vmatpush.msra.mxu0 0.0
    %64 = vmatpush.msra.mxu0 0.0
    %65 = vmatpush.msra.mxu0 0.0
    %66 = vmatpush.msra.mxu0 0.0
    %67 = vmatpush.msra.mxu0 0.0
    %68 = vmatpush.msra.mxu0 0.0
    %69 = vmatpush.msra.mxu0 0.0
    %70 = vmatpush.msra.mxu0 0.0
    %71 = vmatpush.msra.mxu0 0.0
    %72 = vmatpush.msra.mxu0 0.0
    %73 = vmatpush.msra.mxu0 0.0
    %74 = vmatpush.msra.mxu0 0.0
    %75 = vmatpush.msra.mxu0 0.0
    %76 = vmatpush.msra.mxu0 0.0
    %77 = vmatpush.msra.mxu0 0.0
    %78 = vmatpush.msra.mxu0 %v38
    %79 = vmatmul.f32.gmra.mxu0 %v30
    %v80 = vpop.f32.mrf.mxu0
    %v81 = vadd.f32 %v21, %v80
    %82 = vmatmul.f32.gmra.mxu0 %v33
    %v83 = vpop.f32.mrf.mxu0
    %v84 = vadd.f32 %v21, %v83
    %85 = vdwg.mxu0
    %v86 = vpack.c.bf16 %v58, %v58
    %v87 = vpack.c.bf16 %v61, %v61
    %88 = vst [vmem:[#allocation2] sm:$0xf] %v86
    %89 = vst [vmem:[#allocation2 + $0x4] sm:$0xf] %v87
    %v90 = vpack.c.bf16 %v81, %v81
    %v91 = vpack.c.bf16 %v84, %v84
    %s92 = scalar_lea.vmem [#allocation2], 8
    %93 = vst [vmem:[%s92] sm:$0xf] %v90
    %94 = vst [vmem:[%s92 + $0x4] sm:$0xf] %v91
    // Predicated region
    $region14: #{tpu_custom_call.1} parent=1 // pred_check
      _
    $region15: #{tpu_custom_call.1} parent=1 // pred_check_branch
      %96 = sbr.rel (0) target = $region17
    $region16: #{tpu_custom_call.1} parent=1 // pred_region
      %98 = vsyncadd [#allocation3], 0
      %s99 = sshll.u32 [#allocation2], 4
      %s100 = int_to_ptr.vmem [resolvable:$true] %s99
      %s101 = sshll.u32 %s3, 4
      %s102 = int_to_ptr.hbm [resolvable:$true] %s101
      %107 = dma.vmem_to_hbm [thread:$0]  %s100, 256, %s102, [#allocation3], 64, 64, 4
    $region17: #{tpu_custom_call.1} parent=1 // pred_fallthru
      _
    // Predicated region
    $region18: #{tpu_custom_call.1} parent=1 // pred_check
      _
    $region19: #{tpu_custom_call.1} parent=1 // pred_check_branch
      %109 = sbr.rel (0) target = $region21
    $region20: #{tpu_custom_call.1} parent=1 // pred_region
      %111 = dma.done [#allocation3], 256
    $region21: #{tpu_custom_call.1} parent=1 // pred_fallthru
      _
    %112 = vsyncpa [#allocation3], 1

</llo_original>
